<compile_context>
chip_gen: v5e
topology: v5e:2x2
jax: 0.10.0
libtpu: 0.0.40
codegen_flags: <defaults>
</compile_context>

<pallas_src>
import jax
import jax.numpy as jnp
import numpy as np
from jax.experimental import pallas as pl
from jax.experimental.pallas import tpu as pltpu


def _bpr_loss_kernel(scores_ref, diag_ref, mask_i_ref, mask_j_ref, o_ref, acc_ref):
    step = pl.program_id(0)

    @pl.when(step == 0)
    def _():
        acc_ref[...] = jnp.zeros_like(acc_ref)

    s = scores_ref[...]          # (TM, N) f32 : S[i, j] = preds[i, targets[j]]
    d = diag_ref[...]            # (TM, 1) f32 : S[i, i]
    m_i = mask_i_ref[...]        # (TM, 1) f32 : row mask (0 on padded rows)
    m_j = mask_j_ref[...]        # (1,  N) f32 : column mask (un-padded)

    diff = d - s                 # broadcast along lanes
    # Numerically stable log-sigmoid (== torch.nn.functional.logsigmoid).
    logsig = jnp.minimum(diff, 0.0) - jnp.log1p(jnp.exp(-jnp.abs(diff)))

    # Masked double sum for this row tile (VPU mul + XLU lane reduce; no MXU).
    row_sum = jnp.sum(logsig * m_j, axis=1, keepdims=True)       # (TM, 1)
    acc_ref[...] += jnp.sum(row_sum * m_i, keepdims=True)        # (1, 1)

    @pl.when(step == pl.num_programs(0) - 1)
    def _():
        # M = number of non-pad positions.
        m_cnt = jnp.sum(m_j, axis=1, keepdims=True)              # (1, 1)
        # Precondition: at least one non-pad target; otherwise this is 0/0
        # (NaN), matching the degenerate PyTorch behaviour.
        o_ref[...] = -acc_ref[...] / (m_cnt * m_cnt)


def bpr_loss(preds, targets, padd_idx, *, tm=512):
    b, t, v = preds.shape
    n = b * (t - 1)
    preds_flat = preds[:, :-1, :].reshape(n, v)
    tgt_flat = targets.reshape(n).astype(jnp.int32)

    # Cheap XLA gathers in the wrapper: kernel never touches the vocab dim.
    scores = jnp.take(preds_flat, tgt_flat, axis=1).astype(jnp.float32)      # (N, N)
    diag = jnp.take_along_axis(preds_flat, tgt_flat[:, None], axis=1)        # (N, 1)
    diag = diag.astype(jnp.float32)
    mask = (tgt_flat != padd_idx).astype(jnp.float32)                        # (N,)

    # Row-tile size: multiple of 8 sublanes; lane dim carries the full N.
    tm = max(8, min(tm, n))
    tm = (tm // 8) * 8
    n_pad = ((n + tm - 1) // tm) * tm
    pad = n_pad - n
    mask_rows = mask[:, None]                                                # (N, 1)
    if pad:
        scores = jnp.pad(scores, ((0, pad), (0, 0)))
        diag = jnp.pad(diag, ((0, pad), (0, 0)))
        mask_rows = jnp.pad(mask_rows, ((0, pad), (0, 0)))
    mask_cols = mask[None, :]                                                # (1, N)

    grid = (n_pad // tm,)
    out = pl.pallas_call(
        _bpr_loss_kernel,
        out_shape=jax.ShapeDtypeStruct((1, 1), jnp.float32),
        grid_spec=pltpu.PrefetchScalarGridSpec(
            num_scalar_prefetch=0,
            grid=grid,
            in_specs=[
                pl.BlockSpec((tm, n), lambda i: (i, 0)),   # score row tile
                pl.BlockSpec((tm, 1), lambda i: (i, 0)),   # diagonal tile
                pl.BlockSpec((tm, 1), lambda i: (i, 0)),   # row-mask tile
                pl.BlockSpec((1, n), lambda i: (0, 0)),    # full column mask
            ],
            out_specs=pl.BlockSpec((1, 1), lambda i: (0, 0)),
            scratch_shapes=[pltpu.VMEM((1, 1), jnp.float32)],
        ),
        compiler_params=pltpu.CompilerParams(
            # Single grid axis accumulates into one scratch -> "arbitrary".
            dimension_semantics=("arbitrary",),
            vmem_limit_bytes=32 * 1024 * 1024,  # explicit; safe on v5e/v6e/v7x
        ),
    )(scores, diag, mask_rows, mask_cols)
    return out[0, 0]


def _reference_numpy(preds, targets, padd_idx):
    # Mirrors the PyTorch BPRLoss.forward exactly (boolean compaction on host).
    p = np.asarray(preds)[:, :-1, :].reshape(-1, preds.shape[-1])
    t = np.asarray(targets).reshape(-1)
    m = t != padd_idx
    s = p[m][:, t[m]]
    d = np.diag(s)[:, None]
    diff = d - s
    logsig = np.minimum(diff, 0.0) - np.log1p(np.exp(-np.abs(diff)))
    return -logsig.mean()


if __name__ == "__main__":
    padd_idx = 0
    B, T, V = 2, 9, 32          # preds (B, T, V); targets (B, T-1); N = 16

    key = jax.random.PRNGKey(0)
    k1, k2 = jax.random.split(key)
    preds = jax.random.normal(k1, (B, T, V), dtype=jnp.float32)
    # targets in [1, V) so they are valid item ids, then force a few pads.
    targets = jax.random.randint(k2, (B, T - 1), 1, V, dtype=jnp.int32)
    targets = targets.at[0, 0].set(padd_idx)
    targets = targets.at[1, 3].set(padd_idx)
    targets = targets.at[1, 7].set(padd_idx)

    loss = bpr_loss(preds, targets, padd_idx)
    loss = jax.block_until_ready(loss)

    ref = _reference_numpy(preds, targets, padd_idx)
    np.testing.assert_allclose(np.asarray(loss), ref, rtol=1e-4, atol=1e-5)

    print("KERNEL_OK")
</pallas_src>

<mosaic_0001>
module attributes {stable_mosaic.version = 11 : i64} {
  func.func @_bpr_loss_kernel(%arg0: i32, %arg1: memref<16x16xf32, #tpu.memory_space<vmem>>, %arg2: memref<16x1xf32, #tpu.memory_space<vmem>>, %arg3: memref<16x1xf32, #tpu.memory_space<vmem>>, %arg4: memref<1x16xf32, #tpu.memory_space<vmem>>, %arg5: memref<1x1xf32, #tpu.memory_space<vmem>>, %arg6: memref<1x1xf32, #tpu.memory_space<vmem>>) attributes {dimension_semantics = [#tpu.dimension_semantics<arbitrary>], iteration_bounds = array<i64: 1>, scalar_prefetch = 0 : i64, scratch_operands = 1 : i64, tpu.core_type = #tpu.core_type<tc>, window_params = [{transform_indices = @transform_0, window_bounds = array<i64: 16, 16>}, {transform_indices = @transform_1, window_bounds = array<i64: 16, 1>}, {transform_indices = @transform_2, window_bounds = array<i64: 16, 1>}, {pipeline_mode = #tpu.pipeline_mode<synchronous>, transform_indices = @transform_3, window_bounds = array<i64: 1, 16>}, {pipeline_mode = #tpu.pipeline_mode<synchronous>, transform_indices = @transform_4, window_bounds = array<i64: 1, 1>}]} {
    %c0_i32 = arith.constant 0 : i32
    %0 = arith.cmpi eq, %arg0, %c0_i32 : i32
    %1 = arith.extui %0 : i1 to i32
    %c0_i32_0 = arith.constant 0 : i32
    %2 = arith.cmpi ne, %1, %c0_i32_0 : i32
    scf.if %2 {
      %cst_17 = arith.constant 0.000000e+00 : f32
      %33 = vector.broadcast %cst_17 : f32 to vector<1x1xf32>
      %c0_18 = arith.constant 0 : index
      %c0_19 = arith.constant 0 : index
      %34 = vector.load %arg6[%c0_18, %c0_19] : memref<1x1xf32, #tpu.memory_space<vmem>>, vector<1x1xf32>
      tpu.vector_store %arg6[%c0_18, %c0_19], %33 {strides = array<i32>} : memref<1x1xf32, #tpu.memory_space<vmem>>, vector<1x1xf32>,
    } else {
    }
    %c0 = arith.constant 0 : index
    %c0_1 = arith.constant 0 : index
    %3 = vector.load %arg1[%c0, %c0_1] : memref<16x16xf32, #tpu.memory_space<vmem>>, vector<16x16xf32>
    %c0_2 = arith.constant 0 : index
    %c0_3 = arith.constant 0 : index
    %4 = vector.load %arg2[%c0_2, %c0_3] : memref<16x1xf32, #tpu.memory_space<vmem>>, vector<16x1xf32>
    %c0_4 = arith.constant 0 : index
    %c0_5 = arith.constant 0 : index
    %5 = vector.load %arg3[%c0_4, %c0_5] : memref<16x1xf32, #tpu.memory_space<vmem>>, vector<16x1xf32>
    %c0_6 = arith.constant 0 : index
    %c0_7 = arith.constant 0 : index
    %6 = vector.load %arg4[%c0_6, %c0_7] : memref<1x16xf32, #tpu.memory_space<vmem>>, vector<1x16xf32>
    %7 = vector.broadcast %4 : vector<16x1xf32> to vector<16x16xf32>
    %8 = arith.subf %7, %3 : vector<16x16xf32>
    %cst = arith.constant 0.000000e+00 : f32
    %9 = vector.broadcast %cst : f32 to vector<16x16xf32>
    %10 = arith.minimumf %8, %9 : vector<16x16xf32>
    %11 = math.absf %8 : vector<16x16xf32>
    %cst_8 = arith.constant 0.000000e+00 : f32
    %12 = vector.broadcast %cst_8 : f32 to vector<16x16xf32>
    %13 = arith.subf %12, %11 : vector<16x16xf32>
    %14 = math.exp %13 : vector<16x16xf32>
    %15 = math.log1p %14 : vector<16x16xf32>
    %16 = arith.subf %10, %15 : vector<16x16xf32>
    %17 = vector.broadcast %6 : vector<1x16xf32> to vector<16x16xf32>
    %18 = arith.mulf %16, %17 : vector<16x16xf32>
    %cst_9 = arith.constant dense<0.000000e+00> : vector<16xf32>
    %19 = vector.multi_reduction <add>, %18, %cst_9 [1] : vector<16x16xf32> to vector<16xf32>
    %20 = vector.shape_cast %19 : vector<16xf32> to vector<16x1xf32>
    %c0_10 = arith.constant 0 : index
    %c0_11 = arith.constant 0 : index
    %21 = vector.load %arg6[%c0_10, %c0_11] : memref<1x1xf32, #tpu.memory_space<vmem>>, vector<1x1xf32>
    %22 = arith.mulf %20, %5 : vector<16x1xf32>
    %23 = vector.shape_cast %22 : vector<16x1xf32> to vector<1x16x1xf32>
    %cst_12 = arith.constant dense<0.000000e+00> : vector<1xf32>
    %24 = vector.multi_reduction <add>, %23, %cst_12 [1, 2] : vector<1x16x1xf32> to vector<1xf32>
    %25 = vector.shape_cast %24 : vector<1xf32> to vector<1x1x1xf32>
    %26 = vector.extract %25[0, 0, 0] : f32 from vector<1x1x1xf32>
    %27 = vector.broadcast %26 : f32 to vector<1x1xf32>
    %28 = arith.addf %21, %27 : vector<1x1xf32>
    %c0_13 = arith.constant 0 : index
    %c0_14 = arith.constant 0 : index
    %29 = vector.load %arg6[%c0_13, %c0_14] : memref<1x1xf32, #tpu.memory_space<vmem>>, vector<1x1xf32>
    tpu.vector_store %arg6[%c0_13, %c0_14], %28 {strides = array<i32>} : memref<1x1xf32, #tpu.memory_space<vmem>>, vector<1x1xf32>,
    %c0_i32_15 = arith.constant 0 : i32
    %30 = arith.cmpi eq, %arg0, %c0_i32_15 : i32
    %31 = arith.extui %30 : i1 to i32
    %c0_i32_16 = arith.constant 0 : i32
    %32 = arith.cmpi ne, %31, %c0_i32_16 : i32
    scf.if %32 {
      %cst_17 = arith.constant dense<0.000000e+00> : vector<1xf32>
      %33 = vector.multi_reduction <add>, %6, %cst_17 [1] : vector<1x16xf32> to vector<1xf32>
      %34 = vector.shape_cast %33 : vector<1xf32> to vector<1x1xf32>
      %c0_18 = arith.constant 0 : index
      %c0_19 = arith.constant 0 : index
      %35 = vector.load %arg6[%c0_18, %c0_19] : memref<1x1xf32, #tpu.memory_space<vmem>>, vector<1x1xf32>
      %cst_20 = arith.constant 0.000000e+00 : f32
      %36 = vector.broadcast %cst_20 : f32 to vector<1x1xf32>
      %37 = arith.subf %36, %35 : vector<1x1xf32>
      %38 = arith.mulf %34, %34 : vector<1x1xf32>
      %39 = arith.divf %37, %38 : vector<1x1xf32>
      %c0_21 = arith.constant 0 : index
      %c0_22 = arith.constant 0 : index
      %40 = vector.load %arg5[%c0_21, %c0_22] : memref<1x1xf32, #tpu.memory_space<vmem>>, vector<1x1xf32>
      tpu.vector_store %arg5[%c0_21, %c0_22], %39 {strides = array<i32>} : memref<1x1xf32, #tpu.memory_space<vmem>>, vector<1x1xf32>,
    } else {
    }
    return
  }
  func.func @transform_0(%arg0: i32) -> (i32, i32) {
    %c0_i32 = arith.constant 0 : i32
    %c0_i32_0 = arith.constant 0 : i32
    return %arg0, %c0_i32 : i32, i32
  }
  func.func @transform_1(%arg0: i32) -> (i32, i32) {
    %c0_i32 = arith.constant 0 : i32
    %c0_i32_0 = arith.constant 0 : i32
    return %arg0, %c0_i32 : i32, i32
  }
  func.func @transform_2(%arg0: i32) -> (i32, i32) {
    %c0_i32 = arith.constant 0 : i32
    %c0_i32_0 = arith.constant 0 : i32
    return %arg0, %c0_i32 : i32, i32
  }
  func.func @transform_3(%arg0: i32) -> (i32, i32) {
    %c0_i32 = arith.constant 0 : i32
    %c0_i32_0 = arith.constant 0 : i32
    %c0_i32_1 = arith.constant 0 : i32
    return %c0_i32, %c0_i32_0 : i32, i32
  }
  func.func @transform_4(%arg0: i32) -> (i32, i32) {
    %c0_i32 = arith.constant 0 : i32
    %c0_i32_0 = arith.constant 0 : i32
    %c0_i32_1 = arith.constant 0 : i32
    return %c0_i32, %c0_i32_0 : i32, i32
  }
}

</mosaic_0001>

<llo_original>
// kernel: tpu_custom_call.1
$region0: #{tpu_custom_call.1}
  #allocation0 [shape = 'u32[]', space=smem, size = 0x4, offset = 0x4, fixed_abs, tag = 'smem constant byte address 0x4 - core index']
  #allocation1 [shape = 'u32[72,128]{1,0:T(1,128)}', space=vmem, size = 0x9000, scoped, tag = 'internal scratch']
  #allocation2 [shape = 'f32[1,1]{1,0:T(1,128)}', space=vmem, size = 0x200, scoped, tag = 'scratch operand']
  %s0 = inlined_call_operand.vmem [shape: f32[16,16], index: 0, kind: input, shape index: {}]
  %s1 = inlined_call_operand.vmem [shape: f32[16,1], index: 1, kind: input, shape index: {}]
  %s2 = inlined_call_operand.vmem [shape: f32[16,1], index: 2, kind: input, shape index: {}]
  %s3 = inlined_call_operand.vmem [shape: f32[1,16], index: 3, kind: input, shape index: {}]
  %s4 = inlined_call_operand.hbm [shape: f32[1,1], index: 4, kind: output, shape index: {}]
  %s5 = sld [smem:[#allocation0]]
  $region34: #{tpu_custom_call.1} parent=0
    _
  %s7 = ssub.s32 1, %s5
  %s8 = scalar_select 0, %s7, %s5
  $region1: #{tpu_custom_call.1} parent=0
    #allocation3 [shape = 'u8[512]{0}', space=vmem, size = 0x400, scoped, tag = 'output window, operand 0, single buffered']
    #allocation4 [shape = 's32[1]{0}', space=sflag, size = 0x4, scoped, tag = 'scoped memory for tpu_custom_call.1']
    %9 = vsyncpa [#allocation4], 0
    // Predicated region
    $region2: #{tpu_custom_call.1} parent=1 // pred_check
      _
    $region3: #{tpu_custom_call.1} parent=1 // pred_check_branch
      %11 = sbr.rel (0) target = $region5
    $region4: #{tpu_custom_call.1} parent=1 // pred_region
      _
    $region5: #{tpu_custom_call.1} parent=1 // pred_fallthru
      _
    // Predicated region
    $region6: #{tpu_custom_call.1} parent=1 // pred_check
      _
    $region7: #{tpu_custom_call.1} parent=1 // pred_check_branch
      %13 = sbr.rel (0) target = $region9
    $region8: #{tpu_custom_call.1} parent=1 // pred_region
      _
    $region9: #{tpu_custom_call.1} parent=1 // pred_fallthru
      _
    // Predicated region
    $region10: #{tpu_custom_call.1} parent=1 // pred_check
      _
    $region11: #{tpu_custom_call.1} parent=1 // pred_check_branch
      %15 = sbr.rel (0) target = $region13
    $region12: #{tpu_custom_call.1} parent=1 // pred_region
      _
    $region13: #{tpu_custom_call.1} parent=1 // pred_fallthru
      _
    // Predicated region
    $region14: #{tpu_custom_call.1} parent=1 // pred_check
      _
    $region15: #{tpu_custom_call.1} parent=1 // pred_check_branch
      %17 = sbr.rel (0) target = $region17
    $region16: #{tpu_custom_call.1} parent=1 // pred_region
      _
    $region17: #{tpu_custom_call.1} parent=1 // pred_fallthru
      _
    %p18 = scmp.eq.s32.totalorder 0, 0
    // Predicated region
    $region18: #{tpu_custom_call.1} parent=1 // pred_check
      %p19 = pneg %p18
    $region19: #{tpu_custom_call.1} parent=1 // pred_check_branch
      %21 = sbr.rel (%p19) target = $region21
    $region20: #{tpu_custom_call.1} parent=1 // pred_region
      %vm22 = vcmask 0
      %23 = vst.msk [vmem:[#allocation2] sm:$0x1] %vm22, 0.0
    $region21: #{tpu_custom_call.1} parent=1 // pred_fallthru
      _
    %v24 = vld [vmem:[%s0] sm:$0xff]
    %v25 = vld [vmem:[%s0 + $0x8] sm:$0xff]
    %v26 = vld [vmem:[%s1] sm:$0xff]
    %v27 = vld [vmem:[%s1 + $0x8] sm:$0xff]
    %v28 = vld [vmem:[%s2] sm:$0xff]
    %v29 = vld [vmem:[%s2 + $0x8] sm:$0xff]
    %v30 = vld [vmem:[%s3] sm:$0x1]
    %32 = vset.pattern.permute.xlu0 0
    %33 = vperm.xlu0 %32, %v26
    %v34 = vpop.permute.xlu0 %33
    %37 = vset.pattern.permute.xlu0 0
    %38 = vperm.xlu0 %37, %v27
    %v39 = vpop.permute.xlu0 %38
    %v41 = vsub.f32 %v34, %v24
    %v42 = vsub.f32 %v39, %v25
    %v43 = vmin.f32 %v41, 0.0
    %v44 = vmin.f32 %v42, 0.0
    %v45 = vand.u32 2147483647, %v41
    %v46 = vand.u32 2147483647, %v42
    %v47 = vsub.f32 0.0, %v45
    %v48 = vsub.f32 0.0, %v46
    %v49 = vmul.f32 %v47, 1.442695
    %v50 = vpow.pop %v49
    %v51 = vmul.f32 %v48, 1.442695
    %v52 = vpow.pop %v51
    %v53 = vadd.f32 %v50, 1.0
    %v54 = vlog2.pop %v53
    %v55 = vmul.f32 %v54, 0.6931472
    %v56 = vmul.f32 -0.5, %v50
    %v57 = vadd.f32 %v56, 1.0
    %v58 = vmul.f32 %v57, %v50
    %v59 = vand.u32 2147483647, %v50
    %vm60 = vcmp.lt.f32.partialorder %v59, 0.0004427343
    %v61 = vsel %vm60, %v58, %v55
    %v62 = vadd.f32 %v52, 1.0
    %v63 = vlog2.pop %v62
    %v64 = vmul.f32 %v63, 0.6931472
    %v65 = vmul.f32 -0.5, %v52
    %v66 = vadd.f32 %v65, 1.0
    %v67 = vmul.f32 %v66, %v52
    %v68 = vand.u32 2147483647, %v52
    %vm69 = vcmp.lt.f32.partialorder %v68, 0.0004427343
    %v70 = vsel %vm69, %v67, %v64
    %v71 = vsub.f32 %v43, %v61
    %v72 = vsub.f32 %v44, %v70
    %v74 = vperm.slane %v30, 0
    %v76 = vmul.f32 %v71, %v74
    %v77 = vmul.f32 %v72, %v74
    %vm78 = vcmask 130048
    %v79 = vsel %vm78, %v76, 0.0
    %80 = vadd.xlane.f32.xlu0 %v79
    %v81 = vpop.xlane.xlu0 %80
    %v82 = vsel %vm78, %v77, 0.0
    %83 = vadd.xlane.f32.xlu0 %v82
    %v84 = vpop.xlane.xlu0 %83
    %v85 = vld [vmem:[#allocation2] sm:$0x1]
    %v86 = vmul.f32 %v81, %v28
    %v87 = vmul.f32 %v84, %v29
    %vm88 = vcmask 7168
    %v89 = vsel %vm88, %v86, 0.0
    %v90 = vsel %vm88, %v87, 0.0
    %v91 = vadd.f32 %v89, %v90
    %92 = vadd.xlane.f32.xlu0 %v91
    %v93 = vpop.xlane.xlu0 %92
    %v94 = vrot.slane %v93, 4
    %v95 = vadd.f32 %v93, %v94
    %v96 = vrot.slane %v95, 2
    %v97 = vadd.f32 %v95, %v96
    %v98 = vrot.slane %v97, 1
    %v99 = vadd.f32 %v97, %v98
    %s100 = vtos %v99
    %v101 = vstv %s100
    %v102 = vadd.f32 %v85, %v101
    %vm103 = vcmask 0
    %104 = vst.msk [vmem:[#allocation2] sm:$0x1] %vm103, %v102
    // Predicated region
    $region22: #{tpu_custom_call.1} parent=1 // pred_check
      %p105 = pneg %p18
    $region23: #{tpu_custom_call.1} parent=1 // pred_check_branch
      %107 = sbr.rel (%p105) target = $region25
    $region24: #{tpu_custom_call.1} parent=1 // pred_region
      %vm108 = vcmask 122880
      %v109 = vsel %vm108, %v30, 0.0
      %110 = vadd.xlane.f32.xlu0 %v109
      %v111 = vpop.xlane.xlu0 %110
      %v112 = vld [vmem:[#allocation2] sm:$0x1]
      %v113 = vsub.f32 0.0, %v112
      %v114 = vmul.f32 %v111, %v111
      %v115 = vrcp.pop %v114
      %v116 = vmul.f32 %v114, %v115
      %v117 = vsub.f32 1.0, %v116
      %v118 = vmul.f32 %v115, %v117
      %v119 = vadd.f32 %v115, %v118
      %vm120 = vweird.f32 %v114
      %vm121 = vweird.f32 %v115
      %vm122 = vmor %vm120, %vm121
      %v123 = vsel %vm122, %v115, %v119
      %v124 = vand.u32 2147483647, %v114
      %vm125 = vcmp.eq.f32.partialorder %v124, 8.507059e+37
      %v126 = vand.u32 %v114, 2147483648
      %v127 = vor.u32 1.1754944e-38, %v126
      %v128 = vsel %vm125, %v127, %v123
      %v129 = vmul.f32 %v113, %v128
      %130 = vst.msk [vmem:[#allocation3] sm:$0x1] %vm103, %v129
    $region25: #{tpu_custom_call.1} parent=1 // pred_fallthru
      _
    // Predicated region
    $region26: #{tpu_custom_call.1} parent=1 // pred_check
      _
    $region27: #{tpu_custom_call.1} parent=1 // pred_check_branch
      %132 = sbr.rel (0) target = $region29
    $region28: #{tpu_custom_call.1} parent=1 // pred_region
      %134 = vsyncadd [#allocation4], 0
      %s136 = sshll.u32 [#allocation3], 4
      %s137 = int_to_ptr.vmem [resolvable:$true] %s136
      %s138 = sshll.u32 %s4, 4
      %s139 = int_to_ptr.hbm [resolvable:$true] %s138
      %141 = dma.vmem_to_hbm [thread:$0]  %s137, 16, %s139, [#allocation4]
    $region29: #{tpu_custom_call.1} parent=1 // pred_fallthru
      _
    // Predicated region
    $region30: #{tpu_custom_call.1} parent=1 // pred_check
      _
    $region31: #{tpu_custom_call.1} parent=1 // pred_check_branch
      %143 = sbr.rel (0) target = $region33
    $region32: #{tpu_custom_call.1} parent=1 // pred_region
      %145 = dma.done [#allocation4], 16
    $region33: #{tpu_custom_call.1} parent=1 // pred_fallthru
      _
    %146 = vsyncpa [#allocation4], 1

</llo_original>
